<compile_context>
chip_gen: v7x
topology: tpu7x:2x2x1
jax: 0.10.0
libtpu: 0.0.40
codegen_flags: <defaults>
</compile_context>

<pallas_src>
import functools

import jax
import jax.numpy as jnp
from jax.experimental import pallas as pl
from jax.experimental.pallas import tpu as pltpu


def _round_up(n, m):
    return (n + m - 1) // m * m


# ----------------------------- Pallas kernel ------------------------------ #
def _complex_gru_cell_kernel(x_ref, h_ref, wx_ref, wh_ref, bx_ref, bh_ref, out_ref):
    f32 = jnp.float32
    Hp = out_ref.shape[-1] // 2

    # h slab stays f32 for the elementwise update; cast only for the matmul.
    h_f32 = h_ref[...]                                             # (tb, 2*Hp) f32

    # Two dense MXU matmuls (f32 accumulation); biases pre-combined host-side.
    gx = jnp.dot(x_ref[...], wx_ref[...], preferred_element_type=f32) + bx_ref[...]
    gh = jnp.dot(h_f32.astype(wh_ref.dtype), wh_ref[...],
                 preferred_element_type=f32) + bh_ref[...]

    # Column chunks (each Hp wide, lane-tile aligned):
    #   0 reset | 1 update | 2 candidate,  real = chunks 0..2, imag = chunks 3..5
    def cx(k):
        return gx[:, k * Hp:(k + 1) * Hp]

    def ch(k):
        return gh[:, k * Hp:(k + 1) * Hp]

    rr = jax.nn.sigmoid(cx(0) + ch(0))      # reset,  real
    zr = jax.nn.sigmoid(cx(1) + ch(1))      # update, real
    ri = jax.nn.sigmoid(cx(3) + ch(3))      # reset,  imag
    zi = jax.nn.sigmoid(cx(4) + ch(4))      # update, imag

    cxr, cxi = cx(2), cx(5)                 # W3(x) real / imag (bias included)
    chr_, chi = ch(2), ch(5)                # R3(h) real / imag (bias included)

    # n = complex_tanh(W3(x) + r * R3(h))       (complex multiply)
    nr = jnp.tanh(cxr + rr * chr_ - ri * chi)
    ni = jnp.tanh(cxi + rr * chi + ri * chr_)

    # h_new = (1 - z) * n + z * h               (complex multiplies)
    hr = h_f32[:, :Hp]
    hi = h_f32[:, Hp:]
    out_ref[:, :Hp] = (1.0 - zr) * nr + zi * ni + zr * hr - zi * hi
    out_ref[:, Hp:] = (1.0 - zr) * ni - zi * nr + zr * hi + zi * hr


# ------------------ single-buffered resident-weight specs ------------------ #
def _probe_copy_kernel(x_ref, o_ref):
    o_ref[...] = x_ref[...]


@functools.lru_cache(maxsize=None)
def _single_buffer_supported():
    """True iff pl.BlockSpec(..., pipeline_mode=pl.Buffered(1)) lowers on this JAX."""
    buffered = getattr(pl, "Buffered", None)
    if buffered is None:
        return False
    try:
        spec = pl.BlockSpec((8, 128), lambda i: (0, 0), pipeline_mode=buffered(1))
        fn = pl.pallas_call(
            _probe_copy_kernel,
            out_shape=jax.ShapeDtypeStruct((8, 128), jnp.float32),
            grid=(1,),
            in_specs=[spec],
            out_specs=pl.BlockSpec((8, 128), lambda i: (0, 0)),
        )
        jax.block_until_ready(fn(jnp.zeros((8, 128), jnp.float32)))
        return True
    except Exception:
        return False


def _resident_spec(shape, single_buffer):
    """Constant-index (VMEM-resident) spec for weights/biases."""
    if single_buffer:
        return pl.BlockSpec(shape, lambda i: (0, 0), pipeline_mode=pl.Buffered(1))
    return pl.BlockSpec(shape, lambda i: (0, 0))


# ------------------------------ JAX wrapper -------------------------------- #
def complex_gru_cell(x, h, params, block_b=256):
    """x: complex64 (B, I), h: complex64 (B, H) -> h_new complex64 (B, H)."""
    return _complex_gru_cell_impl(
        x, h, params, block_b=block_b,
        single_buffer_weights=_single_buffer_supported())


@functools.partial(jax.jit, static_argnames=("block_b", "single_buffer_weights"))
def _complex_gru_cell_impl(x, h, params, *, block_b, single_buffer_weights):
    B, H = h.shape
    I = x.shape[1]

    wx, wh = params["Wx"], params["Wh"]        # pre-cast to compute dtype host-side
    bx, bh = params["bx"], params["bh"]        # f32
    Ip = wx.shape[0] // 2
    Hp = wh.shape[0] // 2
    assert wx.shape[1] == wh.shape[1] == 6 * Hp
    assert Ip >= I and Hp >= H

    # Divisor-aware batch tile; >=2 grid steps when B allows (v7x megacore).
    sub = 16 if wx.dtype == jnp.bfloat16 else 8
    n_tiles = max(pl.cdiv(B, block_b), min(2, pl.cdiv(B, sub)))
    tb = _round_up(pl.cdiv(B, n_tiles), sub)
    Bp = n_tiles * tb

    def pack_ri(z, cols, cols_pad, dtype):
        """complex (B, cols) -> zero-padded [Re | Im] slab (Bp, 2*cols_pad)."""
        re = jnp.pad(jnp.real(z).astype(jnp.float32),
                     ((0, Bp - B), (0, cols_pad - cols)))
        im = jnp.pad(jnp.imag(z).astype(jnp.float32),
                     ((0, Bp - B), (0, cols_pad - cols)))
        return jnp.concatenate([re, im], axis=1).astype(dtype)

    X = pack_ri(x, I, Ip, wx.dtype)            # (Bp, 2*Ip)  matmul dtype
    Hc = pack_ri(h, H, Hp, jnp.float32)        # (Bp, 2*Hp)  f32

    # VMEM budget: resident weights (single buffer) + double-buffered tiles + temps.
    wbytes = (wx.size * wx.dtype.itemsize + wh.size * wh.dtype.itemsize
              + (bx.size + bh.size) * 4)
    tile_bytes = (tb * 2 * Ip * X.dtype.itemsize   # x tile
                  + tb * 2 * Hp * 4                # h tile
                  + tb * 2 * Hp * 4)               # out tile
    tmp_bytes = 4 * tb * 6 * Hp * 4                # gx / gh / elementwise temps
    vmem_limit = int(min(128 << 20,
                         max(32 << 20, wbytes + 2 * tile_bytes + tmp_bytes + (4 << 20))))

    cost = pl.CostEstimate(
        flops=int(2 * Bp * (2 * Ip + 2 * Hp) * 6 * Hp + 30 * Bp * Hp),
        transcendentals=int(6 * Bp * Hp),
        bytes_accessed=int(Bp * 2 * Ip * X.dtype.itemsize + 2 * Bp * 2 * Hp * 4 + wbytes),
    )

    out = pl.pallas_call(
        _complex_gru_cell_kernel,
        out_shape=jax.ShapeDtypeStruct((Bp, 2 * Hp), jnp.float32),
        grid_spec=pltpu.PrefetchScalarGridSpec(
            num_scalar_prefetch=0,
            grid=(n_tiles,),
            in_specs=[
                pl.BlockSpec((tb, 2 * Ip), lambda i: (i, 0)),          # [xr | xi] tile
                pl.BlockSpec((tb, 2 * Hp), lambda i: (i, 0)),          # [hr | hi] tile
                _resident_spec((2 * Ip, 6 * Hp), single_buffer_weights),  # Wx
                _resident_spec((2 * Hp, 6 * Hp), single_buffer_weights),  # Wh
                _resident_spec((1, 6 * Hp), single_buffer_weights),       # bx
                _resident_spec((1, 6 * Hp), single_buffer_weights),       # bh
            ],
            out_specs=pl.BlockSpec((tb, 2 * Hp), lambda i: (i, 0)),    # [out_r | out_i]
        ),
        compiler_params=pltpu.CompilerParams(
            dimension_semantics=("parallel",),      # shard batch tiles on v7x megacore
            vmem_limit_bytes=vmem_limit),
        cost_estimate=cost,
    )(X, Hc, wx, wh, bx, bh)

    out_r = out[:B, :H]
    out_i = out[:B, Hp:Hp + H]
    return (out_r + 1j * out_i).astype(jnp.complex64)


# ------------------------- deterministic parameters ------------------------ #
def init_params(key, input_length, hidden_length):
    """Per-gate ComplexLinear parameters, torch.nn.Linear-style init."""
    I, H = input_length, hidden_length
    keys = iter(jax.random.split(key, 24))

    def linear(fan_in):
        bound = 1.0 / jnp.sqrt(jnp.float32(fan_in))
        W = jax.random.uniform(next(keys), (fan_in, H), jnp.float32, -bound, bound)
        b = jax.random.uniform(next(keys), (H,), jnp.float32, -bound, bound)
        return W, b

    per_gate = {}
    for name, fan_in in (("w1", I), ("r1", H), ("w2", I), ("r2", H), ("w3", I), ("r3", H)):
        Wr, br = linear(fan_in)
        Wi, bi = linear(fan_in)
        per_gate[name] = (Wr, br, Wi, bi)
    return per_gate


def build_fused_params(per_gate, input_length, hidden_length, compute_dtype=jnp.float32):
    """Pack the 12 real linears into two dense matmuls with aligned gate chunks.

    Wx: (2*Ip, 6*Hp) rows = [xr | xi];  Wh: (2*Hp, 6*Hp) rows = [hr | hi]
    cols = [reset_r | update_r | cand_r | reset_i | update_i | cand_i], each Hp wide.
    Ip = round_up(I, 64), Hp = round_up(H, 128): gate chunks are lane-tile aligned
    and the packed h / output slabs are lane-dense.  No structural-zero blocks.
    """
    I, H = input_length, hidden_length
    Ip = _round_up(max(I, 1), 64)
    Hp = _round_up(max(H, 1), 128)

    def Wr(n): return per_gate[n][0]
    def br(n): return per_gate[n][1]
    def Wi(n): return per_gate[n][2]
    def bi(n): return per_gate[n][3]

    def padw(w, rows):
        return jnp.pad(w, ((0, rows - w.shape[0]), (0, Hp - w.shape[1])))

    def padb(v):
        return jnp.pad(v, (0, Hp - v.shape[0]))

    def fuse(gates, rows):
        # real-input rows: [Wr ... | Wi ...];  imag-input rows: [-Wi ... | Wr ...]
        top = jnp.concatenate([padw(Wr(g), rows) for g in gates]
                              + [padw(Wi(g), rows) for g in gates], axis=1)
        bot = jnp.concatenate([padw(-Wi(g), rows) for g in gates]
                              + [padw(Wr(g), rows) for g in gates], axis=1)
        return jnp.concatenate([top, bot], axis=0)

    Wx = fuse(("w1", "w2", "w3"), Ip).astype(compute_dtype)   # (2*Ip, 6*Hp)
    Wh = fuse(("r1", "r2", "r3"), Hp).astype(compute_dtype)   # (2*Hp, 6*Hp)

    zero = jnp.zeros((Hp,), jnp.float32)
    bx = jnp.concatenate([
        padb(br("w1") - bi("w1") + br("r1") - bi("r1")),   # reset,  real
        padb(br("w2") - bi("w2") + br("r2") - bi("r2")),   # update, real
        padb(br("w3") - bi("w3")),                         # cand_x, real
        padb(br("w1") + bi("w1") + br("r1") + bi("r1")),   # reset,  imag
        padb(br("w2") + bi("w2") + br("r2") + bi("r2")),   # update, imag
        padb(br("w3") + bi("w3")),                         # cand_x, imag
    ])[None, :].astype(jnp.float32)
    bh = jnp.concatenate([
        zero, zero, padb(br("r3") - bi("r3")),             # cand_h, real
        zero, zero, padb(br("r3") + bi("r3")),             # cand_h, imag
    ])[None, :].astype(jnp.float32)

    return {"Wx": Wx, "Wh": Wh, "bx": bx, "bh": bh}


# ---------------------------- pure-JAX reference --------------------------- #
def reference_forward(x, h, per_gate):
    hp = jax.lax.Precision.HIGHEST  # keep the reference at true-f32 matmul precision

    def clinear(z, p):
        Wr, br, Wi, bi = p
        re, im = jnp.real(z), jnp.imag(z)
        fr = lambda t: jnp.dot(t, Wr, precision=hp) + br
        fi = lambda t: jnp.dot(t, Wi, precision=hp) + bi
        return (fr(re) - fi(im)) + 1j * (fr(im) + fi(re))

    csig = lambda z: jax.nn.sigmoid(jnp.real(z)) + 1j * jax.nn.sigmoid(jnp.imag(z))
    ctanh = lambda z: jnp.tanh(jnp.real(z)) + 1j * jnp.tanh(jnp.imag(z))

    r = csig(clinear(x, per_gate["w1"]) + clinear(h, per_gate["r1"]))
    z = csig(clinear(h, per_gate["r2"]) + clinear(x, per_gate["w2"]))
    n = ctanh(clinear(x, per_gate["w3"]) + r * clinear(h, per_gate["r3"]))
    return (1.0 - z) * n + z * h


# ---------------------------------- main ----------------------------------- #
if __name__ == "__main__":
    B, I, H = 2, 16, 32
    key = jax.random.PRNGKey(0)
    k_params, kx1, kx2, kh1, kh2 = jax.random.split(key, 5)

    per_gate = init_params(k_params, I, H)
    params_f32 = build_fused_params(per_gate, I, H, compute_dtype=jnp.float32)
    params_bf16 = build_fused_params(per_gate, I, H, compute_dtype=jnp.bfloat16)

    x = (jax.random.normal(kx1, (B, I), jnp.float32)
         + 1j * jax.random.normal(kx2, (B, I), jnp.float32)).astype(jnp.complex64)
    h = (jax.random.normal(kh1, (B, H), jnp.float32)
         + 1j * jax.random.normal(kh2, (B, H), jnp.float32)).astype(jnp.complex64)

    h_ref = reference_forward(x, h, per_gate)

    # f32 matmul path.
    h_new = jax.block_until_ready(complex_gru_cell(x, h, params_f32))
    assert h_new.shape == (B, H) and h_new.dtype == jnp.complex64
    err_f32 = float(jnp.max(jnp.abs(h_new - h_ref)))
    assert err_f32 < 5e-3, f"f32 path mismatch vs reference: max err {err_f32}"

    # bf16 matmul-input path (f32 accumulation, f32 elementwise update).
    h_bf16 = jax.block_until_ready(complex_gru_cell(x, h, params_bf16))
    assert h_bf16.shape == (B, H) and h_bf16.dtype == jnp.complex64
    err_bf16 = float(jnp.max(jnp.abs(h_bf16 - h_ref)))
    assert err_bf16 < 5e-2, f"bf16 path mismatch vs reference: max err {err_bf16}"

    print("KERNEL_OK")
</pallas_src>

<mosaic_0001>
module attributes {stable_mosaic.version = 11 : i64} {
  func.func @_probe_copy_kernel(%arg0: i32, %arg1: memref<8x128xf32, #tpu.memory_space<vmem>>, %arg2: memref<8x128xf32, #tpu.memory_space<vmem>>) attributes {dimension_semantics = [#tpu.dimension_semantics<arbitrary>], iteration_bounds = array<i64: 1>, scalar_prefetch = 0 : i64, scratch_operands = 0 : i64, tpu.core_type = #tpu.core_type<tc>, window_params = [{pipeline_mode = #tpu.pipeline_mode<synchronous>, transform_indices = @transform_0, window_bounds = array<i64: 8, 128>}, {pipeline_mode = #tpu.pipeline_mode<synchronous>, transform_indices = @transform_1, window_bounds = array<i64: 8, 128>}]} {
    %c0 = arith.constant 0 : index
    %c0_0 = arith.constant 0 : index
    %0 = vector.load %arg1[%c0, %c0_0] : memref<8x128xf32, #tpu.memory_space<vmem>>, vector<8x128xf32>
    %c0_1 = arith.constant 0 : index
    %c0_2 = arith.constant 0 : index
    %1 = vector.load %arg2[%c0_1, %c0_2] : memref<8x128xf32, #tpu.memory_space<vmem>>, vector<8x128xf32>
    tpu.vector_store %arg2[%c0_1, %c0_2], %0 {strides = array<i32>} : memref<8x128xf32, #tpu.memory_space<vmem>>, vector<8x128xf32>,
    return
  }
  func.func @transform_0(%arg0: i32) -> (i32, i32) {
    %c0_i32 = arith.constant 0 : i32
    %c0_i32_0 = arith.constant 0 : i32
    %c0_i32_1 = arith.constant 0 : i32
    return %c0_i32, %c0_i32_0 : i32, i32
  }
  func.func @transform_1(%arg0: i32) -> (i32, i32) {
    %c0_i32 = arith.constant 0 : i32
    %c0_i32_0 = arith.constant 0 : i32
    %c0_i32_1 = arith.constant 0 : i32
    return %c0_i32, %c0_i32_0 : i32, i32
  }
}

module attributes {stable_mosaic.version = 11 : i64} {
  func.func @_complex_gru_cell_kernel(%arg0: i32, %arg1: memref<8x128xf32, #tpu.memory_space<vmem>>, %arg2: memref<8x256xf32, #tpu.memory_space<vmem>>, %arg3: memref<128x768xf32, #tpu.memory_space<vmem>>, %arg4: memref<256x768xf32, #tpu.memory_space<vmem>>, %arg5: memref<1x768xf32, #tpu.memory_space<vmem>>, %arg6: memref<1x768xf32, #tpu.memory_space<vmem>>, %arg7: memref<8x256xf32, #tpu.memory_space<vmem>>) attributes {dimension_semantics = [#tpu.dimension_semantics<parallel>], iteration_bounds = array<i64: 1>, scalar_prefetch = 0 : i64, scratch_operands = 0 : i64, tpu.core_type = #tpu.core_type<tc>, window_params = [{transform_indices = @transform_0, window_bounds = array<i64: 8, 128>}, {transform_indices = @transform_1, window_bounds = array<i64: 8, 256>}, {pipeline_mode = #tpu.pipeline_mode<synchronous>, transform_indices = @transform_2, window_bounds = array<i64: 128, 768>}, {pipeline_mode = #tpu.pipeline_mode<synchronous>, transform_indices = @transform_3, window_bounds = array<i64: 256, 768>}, {pipeline_mode = #tpu.pipeline_mode<synchronous>, transform_indices = @transform_4, window_bounds = array<i64: 1, 768>}, {pipeline_mode = #tpu.pipeline_mode<synchronous>, transform_indices = @transform_5, window_bounds = array<i64: 1, 768>}, {transform_indices = @transform_6, window_bounds = array<i64: 8, 256>}]} {
    %c0 = arith.constant 0 : index
    %c0_0 = arith.constant 0 : index
    %0 = vector.load %arg2[%c0, %c0_0] : memref<8x256xf32, #tpu.memory_space<vmem>>, vector<8x256xf32>
    %c0_1 = arith.constant 0 : index
    %c0_2 = arith.constant 0 : index
    %1 = vector.load %arg1[%c0_1, %c0_2] : memref<8x128xf32, #tpu.memory_space<vmem>>, vector<8x128xf32>
    %c0_3 = arith.constant 0 : index
    %c0_4 = arith.constant 0 : index
    %2 = vector.load %arg3[%c0_3, %c0_4] : memref<128x768xf32, #tpu.memory_space<vmem>>, vector<128x768xf32>
    %cst = arith.constant dense<0.000000e+00> : vector<8x768xf32>
    %3 = tpu.matmul %1, %2, %cst {dimension_numbers = #tpu.dot_dimension_numbers<[1], [0], [0], [1], [0, 0, 1, 1], [], []>} : vector<8x128xf32>, vector<128x768xf32>, vector<8x768xf32> -> vector<8x768xf32>
    %c0_5 = arith.constant 0 : index
    %c0_6 = arith.constant 0 : index
    %4 = vector.load %arg5[%c0_5, %c0_6] : memref<1x768xf32, #tpu.memory_space<vmem>>, vector<1x768xf32>
    %5 = vector.broadcast %4 : vector<1x768xf32> to vector<8x768xf32>
    %6 = arith.addf %3, %5 : vector<8x768xf32>
    %c0_7 = arith.constant 0 : index
    %c0_8 = arith.constant 0 : index
    %7 = vector.load %arg4[%c0_7, %c0_8] : memref<256x768xf32, #tpu.memory_space<vmem>>, vector<256x768xf32>
    %cst_9 = arith.constant dense<0.000000e+00> : vector<8x768xf32>
    %8 = tpu.matmul %0, %7, %cst_9 {dimension_numbers = #tpu.dot_dimension_numbers<[1], [0], [0], [1], [0, 0, 1, 1], [], []>} : vector<8x256xf32>, vector<256x768xf32>, vector<8x768xf32> -> vector<8x768xf32>
    %c0_10 = arith.constant 0 : index
    %c0_11 = arith.constant 0 : index
    %9 = vector.load %arg6[%c0_10, %c0_11] : memref<1x768xf32, #tpu.memory_space<vmem>>, vector<1x768xf32>
    %10 = vector.broadcast %9 : vector<1x768xf32> to vector<8x768xf32>
    %11 = arith.addf %8, %10 : vector<8x768xf32>
    %12 = vector.extract_strided_slice %6 {offsets = [0, 0], sizes = [8, 128], strides = [1, 1]} : vector<8x768xf32> to vector<8x128xf32>
    %13 = vector.extract_strided_slice %11 {offsets = [0, 0], sizes = [8, 128], strides = [1, 1]} : vector<8x768xf32> to vector<8x128xf32>
    %14 = arith.addf %12, %13 : vector<8x128xf32>
    %15 = arith.negf %14 : vector<8x128xf32>
    %16 = math.exp %15 : vector<8x128xf32>
    %cst_12 = arith.constant 1.000000e+00 : f32
    %17 = vector.broadcast %cst_12 : f32 to vector<8x128xf32>
    %18 = arith.addf %17, %16 : vector<8x128xf32>
    %19 = arith.divf %17, %18 : vector<8x128xf32>
    %20 = vector.extract_strided_slice %6 {offsets = [0, 128], sizes = [8, 128], strides = [1, 1]} : vector<8x768xf32> to vector<8x128xf32>
    %21 = vector.extract_strided_slice %11 {offsets = [0, 128], sizes = [8, 128], strides = [1, 1]} : vector<8x768xf32> to vector<8x128xf32>
    %22 = arith.addf %20, %21 : vector<8x128xf32>
    %23 = arith.negf %22 : vector<8x128xf32>
    %24 = math.exp %23 : vector<8x128xf32>
    %cst_13 = arith.constant 1.000000e+00 : f32
    %25 = vector.broadcast %cst_13 : f32 to vector<8x128xf32>
    %26 = arith.addf %25, %24 : vector<8x128xf32>
    %27 = arith.divf %25, %26 : vector<8x128xf32>
    %28 = vector.extract_strided_slice %6 {offsets = [0, 384], sizes = [8, 128], strides = [1, 1]} : vector<8x768xf32> to vector<8x128xf32>
    %29 = vector.extract_strided_slice %11 {offsets = [0, 384], sizes = [8, 128], strides = [1, 1]} : vector<8x768xf32> to vector<8x128xf32>
    %30 = arith.addf %28, %29 : vector<8x128xf32>
    %31 = arith.negf %30 : vector<8x128xf32>
    %32 = math.exp %31 : vector<8x128xf32>
    %cst_14 = arith.constant 1.000000e+00 : f32
    %33 = vector.broadcast %cst_14 : f32 to vector<8x128xf32>
    %34 = arith.addf %33, %32 : vector<8x128xf32>
    %35 = arith.divf %33, %34 : vector<8x128xf32>
    %36 = vector.extract_strided_slice %6 {offsets = [0, 512], sizes = [8, 128], strides = [1, 1]} : vector<8x768xf32> to vector<8x128xf32>
    %37 = vector.extract_strided_slice %11 {offsets = [0, 512], sizes = [8, 128], strides = [1, 1]} : vector<8x768xf32> to vector<8x128xf32>
    %38 = arith.addf %36, %37 : vector<8x128xf32>
    %39 = arith.negf %38 : vector<8x128xf32>
    %40 = math.exp %39 : vector<8x128xf32>
    %cst_15 = arith.constant 1.000000e+00 : f32
    %41 = vector.broadcast %cst_15 : f32 to vector<8x128xf32>
    %42 = arith.addf %41, %40 : vector<8x128xf32>
    %43 = arith.divf %41, %42 : vector<8x128xf32>
    %44 = vector.extract_strided_slice %6 {offsets = [0, 256], sizes = [8, 128], strides = [1, 1]} : vector<8x768xf32> to vector<8x128xf32>
    %45 = vector.extract_strided_slice %6 {offsets = [0, 640], sizes = [8, 128], strides = [1, 1]} : vector<8x768xf32> to vector<8x128xf32>
    %46 = vector.extract_strided_slice %11 {offsets = [0, 256], sizes = [8, 128], strides = [1, 1]} : vector<8x768xf32> to vector<8x128xf32>
    %47 = vector.extract_strided_slice %11 {offsets = [0, 640], sizes = [8, 128], strides = [1, 1]} : vector<8x768xf32> to vector<8x128xf32>
    %48 = arith.mulf %19, %46 : vector<8x128xf32>
    %49 = arith.addf %44, %48 : vector<8x128xf32>
    %50 = arith.mulf %35, %47 : vector<8x128xf32>
    %51 = arith.subf %49, %50 : vector<8x128xf32>
    %52 = math.tanh %51 : vector<8x128xf32>
    %53 = arith.mulf %19, %47 : vector<8x128xf32>
    %54 = arith.addf %45, %53 : vector<8x128xf32>
    %55 = arith.mulf %35, %46 : vector<8x128xf32>
    %56 = arith.addf %54, %55 : vector<8x128xf32>
    %57 = math.tanh %56 : vector<8x128xf32>
    %58 = vector.extract_strided_slice %0 {offsets = [0, 0], sizes = [8, 128], strides = [1, 1]} : vector<8x256xf32> to vector<8x128xf32>
    %59 = vector.extract_strided_slice %0 {offsets = [0, 128], sizes = [8, 128], strides = [1, 1]} : vector<8x256xf32> to vector<8x128xf32>
    %cst_16 = arith.constant 1.000000e+00 : f32
    %60 = vector.broadcast %cst_16 : f32 to vector<8x128xf32>
    %61 = arith.subf %60, %27 : vector<8x128xf32>
    %62 = arith.mulf %61, %52 : vector<8x128xf32>
    %63 = arith.mulf %43, %57 : vector<8x128xf32>
    %64 = arith.addf %62, %63 : vector<8x128xf32>
    %65 = arith.mulf %27, %58 : vector<8x128xf32>
    %66 = arith.addf %64, %65 : vector<8x128xf32>
    %67 = arith.mulf %43, %59 : vector<8x128xf32>
    %68 = arith.subf %66, %67 : vector<8x128xf32>
    %c0_17 = arith.constant 0 : index
    %c0_18 = arith.constant 0 : index
    %69 = vector.load %arg7[%c0_17, %c0_18] : memref<8x256xf32, #tpu.memory_space<vmem>>, vector<8x128xf32>
    tpu.vector_store %arg7[%c0_17, %c0_18], %68 {strides = array<i32>} : memref<8x256xf32, #tpu.memory_space<vmem>>, vector<8x128xf32>,
    %cst_19 = arith.constant 1.000000e+00 : f32
    %70 = vector.broadcast %cst_19 : f32 to vector<8x128xf32>
    %71 = arith.subf %70, %27 : vector<8x128xf32>
    %72 = arith.mulf %71, %57 : vector<8x128xf32>
    %73 = arith.mulf %43, %52 : vector<8x128xf32>
    %74 = arith.subf %72, %73 : vector<8x128xf32>
    %75 = arith.mulf %27, %59 : vector<8x128xf32>
    %76 = arith.addf %74, %75 : vector<8x128xf32>
    %77 = arith.mulf %43, %58 : vector<8x128xf32>
    %78 = arith.addf %76, %77 : vector<8x128xf32>
    %c0_20 = arith.constant 0 : index
    %c128 = arith.constant 128 : index
    %79 = vector.load %arg7[%c0_20, %c128] : memref<8x256xf32, #tpu.memory_space<vmem>>, vector<8x128xf32>
    tpu.vector_store %arg7[%c0_20, %c128], %78 {strides = array<i32>} : memref<8x256xf32, #tpu.memory_space<vmem>>, vector<8x128xf32>,
    return
  }
  func.func @transform_0(%arg0: i32) -> (i32, i32) {
    %c0_i32 = arith.constant 0 : i32
    %c0_i32_0 = arith.constant 0 : i32
    return %arg0, %c0_i32 : i32, i32
  }
  func.func @transform_1(%arg0: i32) -> (i32, i32) {
    %c0_i32 = arith.constant 0 : i32
    %c0_i32_0 = arith.constant 0 : i32
    return %arg0, %c0_i32 : i32, i32
  }
  func.func @transform_2(%arg0: i32) -> (i32, i32) {
    %c0_i32 = arith.constant 0 : i32
    %c0_i32_0 = arith.constant 0 : i32
    %c0_i32_1 = arith.constant 0 : i32
    return %c0_i32, %c0_i32_0 : i32, i32
  }
  func.func @transform_3(%arg0: i32) -> (i32, i32) {
    %c0_i32 = arith.constant 0 : i32
    %c0_i32_0 = arith.constant 0 : i32
    %c0_i32_1 = arith.constant 0 : i32
    return %c0_i32, %c0_i32_0 : i32, i32
  }
  func.func @transform_4(%arg0: i32) -> (i32, i32) {
    %c0_i32 = arith.constant 0 : i32
    %c0_i32_0 = arith.constant 0 : i32
    %c0_i32_1 = arith.constant 0 : i32
    return %c0_i32, %c0_i32_0 : i32, i32
  }
  func.func @transform_5(%arg0: i32) -> (i32, i32) {
    %c0_i32 = arith.constant 0 : i32
    %c0_i32_0 = arith.constant 0 : i32
    %c0_i32_1 = arith.constant 0 : i32
    return %c0_i32, %c0_i32_0 : i32, i32
  }
  func.func @transform_6(%arg0: i32) -> (i32, i32) {
    %c0_i32 = arith.constant 0 : i32
    %c0_i32_0 = arith.constant 0 : i32
    return %arg0, %c0_i32 : i32, i32
  }
}

</mosaic_0001>

<llo_original>
// kernel: tpu_custom_call.1
$region0: #{tpu_custom_call.1}
  #allocation0 [shape = 'u32[]', space=smem, size = 0x4, offset = 0x4, fixed_abs, tag = 'smem constant byte address 0x4 - core index']
  #allocation1 [shape = 'u32[144,128]{1,0:T(1,128)}', space=vmem, size = 0x12000, scoped, tag = 'internal scratch']
  %s0 = inlined_call_operand.hbm [shape: f32[8,128], index: 0, kind: input, shape index: {}]
  %s1 = inlined_call_operand.hbm [shape: f32[8,128], index: 1, kind: output, shape index: {}]
  %s2 = sld [smem:[#allocation0]]
  $region18: #{tpu_custom_call.1} parent=0
    _
  %s4 = ssub.s32 1, %s2
  %s5 = scalar_select 0, %s4, %s2
  $region1: #{tpu_custom_call.1} parent=0
    #allocation2 [shape = 'u8[4096]{0}', space=vmem, size = 0x1000, scoped, tag = 'input window, operand 0, single buffered']
    #allocation3 [shape = 's32[1]{0}', space=sflag, size = 0x4, scoped, tag = 'scoped memory for tpu_custom_call.1']
    #allocation4 [shape = 's32[1]{0}', space=sflag, size = 0x4, scoped, tag = 'scoped memory for tpu_custom_call.1']
    #allocation5 [shape = 'u8[4096]{0}', space=vmem, size = 0x1000, scoped, tag = 'output window, operand 0, single buffered']
    %6 = vsyncpa [#allocation3], 0
    %7 = vsyncpa [#allocation4], 0
    // Predicated region
    $region2: #{tpu_custom_call.1} parent=1 // pred_check
      _
    $region3: #{tpu_custom_call.1} parent=1 // pred_check_branch
      %9 = sbr.rel (0) target = $region5
    $region4: #{tpu_custom_call.1} parent=1 // pred_region
      %s11 = ssub.s32 128, 128
      %12 = vsyncadd [#allocation3], %s11
      %s14 = sshll.u32 [#allocation2], 4
      %s15 = int_to_ptr.vmem [resolvable:$true] %s14
      %17 = dma.hbm_to_vmem [thread:$0]  %s0, 128, %s15, [#allocation3]
    $region5: #{tpu_custom_call.1} parent=1 // pred_fallthru
      _
    // Predicated region
    $region6: #{tpu_custom_call.1} parent=1 // pred_check
      _
    $region7: #{tpu_custom_call.1} parent=1 // pred_check_branch
      %19 = sbr.rel (0) target = $region9
    $region8: #{tpu_custom_call.1} parent=1 // pred_region
      %20 = dma.done [#allocation3], 128
    $region9: #{tpu_custom_call.1} parent=1 // pred_fallthru
      _
    %v21 = vld [vmem:[#allocation2] sm:$0xff]
    %22 = vst [vmem:[#allocation5] sm:$0xff] %v21
    // Predicated region
    $region10: #{tpu_custom_call.1} parent=1 // pred_check
      _
    $region11: #{tpu_custom_call.1} parent=1 // pred_check_branch
      %24 = sbr.rel (0) target = $region13
    $region12: #{tpu_custom_call.1} parent=1 // pred_region
      %s26 = ssub.s32 128, 128
      %27 = vsyncadd [#allocation4], %s26
      %s29 = sshll.u32 [#allocation5], 4
      %s30 = int_to_ptr.vmem [resolvable:$true] %s29
      %32 = dma.vmem_to_hbm [thread:$0]  %s30, 128, %s1, [#allocation4]
    $region13: #{tpu_custom_call.1} parent=1 // pred_fallthru
      _
    // Predicated region
    $region14: #{tpu_custom_call.1} parent=1 // pred_check
      _
    $region15: #{tpu_custom_call.1} parent=1 // pred_check_branch
      %34 = sbr.rel (0) target = $region17
    $region16: #{tpu_custom_call.1} parent=1 // pred_region
      %35 = dma.done [#allocation4], 128
    $region17: #{tpu_custom_call.1} parent=1 // pred_fallthru
      _
    %36 = vsyncpa [#allocation3], 1
    %37 = vsyncpa [#allocation4], 1

// kernel: custom-call
$region0: #{custom-call}
  %s0 = inlined_call_operand.hbm [shape: c64[2,16], index: 0, kind: input, shape index: {}]
  %s1 = inlined_call_operand.vmem [shape: f32[2,16], index: 1, kind: output, shape index: {}]
  $region1: #{custom-call} parent=0
    #allocation0 [shape = 's32[1]{0}', space=sflag, size = 0x4, scoped, tag = 'scoped memory for custom-call']
    %2 = vsyncpa [#allocation0], 0
    %s3 = sshll.u32 %s1, 4
    %s4 = int_to_ptr.vmem [resolvable:$true] %s3
    %6 = dma.hbm_to_vmem [thread:$0]  %s0, 32, %s4, [#allocation0]
    %7 = dma.done [#allocation0], 32
    %8 = vsyncpa [#allocation0], 1

// kernel: custom-call.2
$region0: #{custom-call.2}
  %s0 = inlined_call_operand.hbm [shape: c64[2,32], index: 0, kind: input, shape index: {}]
  %s1 = inlined_call_operand.vmem [shape: f32[2,32], index: 1, kind: output, shape index: {}]
  $region1: #{custom-call.2} parent=0
    #allocation0 [shape = 's32[1]{0}', space=sflag, size = 0x4, scoped, tag = 'scoped memory for custom-call.2']
    %2 = vsyncpa [#allocation0], 0
    %s3 = sshll.u32 %s1, 4
    %s4 = int_to_ptr.vmem [resolvable:$true] %s3
    %6 = dma.hbm_to_vmem [thread:$0]  %s0, 32, %s4, [#allocation0]
    %7 = dma.done [#allocation0], 32
    %8 = vsyncpa [#allocation0], 1

// kernel: custom-call.3
$region0: #{custom-call.3}
  %s0 = inlined_call_operand.hbm [shape: c64[2,32], index: 0, kind: input, shape index: {}]
  %s1 = inlined_call_operand.vmem [shape: f32[2,32], index: 1, kind: output, shape index: {}]
  %s2 = scalar_lea.hbm %s0, 32
  $region1: #{custom-call.3} parent=0
    #allocation0 [shape = 's32[1]{0}', space=sflag, size = 0x4, scoped, tag = 'scoped memory for custom-call.3']
    %3 = vsyncpa [#allocation0], 0
    %s4 = sshll.u32 %s1, 4
    %s5 = int_to_ptr.vmem [resolvable:$true] %s4
    %7 = dma.hbm_to_vmem [thread:$0]  %s2, 32, %s5, [#allocation0]
    %8 = dma.done [#allocation0], 32
    %9 = vsyncpa [#allocation0], 1

// kernel: custom-call.1
$region0: #{custom-call.1}
  %s0 = inlined_call_operand.hbm [shape: c64[2,16], index: 0, kind: input, shape index: {}]
  %s1 = inlined_call_operand.vmem [shape: f32[2,16], index: 1, kind: output, shape index: {}]
  %s2 = scalar_lea.hbm %s0, 32
  $region1: #{custom-call.1} parent=0
    #allocation0 [shape = 's32[1]{0}', space=sflag, size = 0x4, scoped, tag = 'scoped memory for custom-call.1']
    %3 = vsyncpa [#allocation0], 0
    %s4 = sshll.u32 %s1, 4
    %s5 = int_to_ptr.vmem [resolvable:$true] %s4
    %7 = dma.hbm_to_vmem [thread:$0]  %s2, 32, %s5, [#allocation0]
    %8 = dma.done [#allocation0], 32
    %9 = vsyncpa [#allocation0], 1

// kernel: custom-call.4
$region0: #{custom-call.4}
  %s0 = inlined_call_operand.vmem [shape: f32[2,32], index: 0, kind: input, shape index: {}]
  %s1 = inlined_call_operand.vmem [shape: f32[2,32], index: 1, kind: input, shape index: {}]
  %s2 = inlined_call_operand.hbm [shape: c64[2,32], index: 2, kind: output, shape index: {}]
  %s3 = scalar_lea.hbm %s2, 32
  $region1: #{custom-call.4} parent=0
    #allocation0 [shape = 's32[1]{0}', space=sflag, size = 0x4, scoped, tag = 'scoped memory for custom-call.4']
    %4 = vsyncpa [#allocation0], 0
    %s5 = sshll.u32 %s0, 4
    %s6 = int_to_ptr.vmem [resolvable:$true] %s5
    %8 = dma.vmem_to_hbm [thread:$0]  %s6, 32, %s2, [#allocation0]
    %9 = dma.done [#allocation0], 32
    %10 = vsyncpa [#allocation0], 1
  $region2: #{custom-call.4} parent=0
    #allocation1 [shape = 's32[1]{0}', space=sflag, size = 0x4, scoped, tag = 'scoped memory for custom-call.4']
    %11 = vsyncpa [#allocation1], 0
    %s12 = sshll.u32 %s1, 4
    %s13 = int_to_ptr.vmem [resolvable:$true] %s12
    %15 = dma.vmem_to_hbm [thread:$0]  %s13, 32, %s3, [#allocation1]
    %16 = dma.done [#allocation1], 32
    %17 = vsyncpa [#allocation1], 1

// kernel: _complex_gru_cell_impl.1
$region0: #{_complex_gru_cell_impl.1}
  #allocation0 [shape = 'u32[]', space=smem, size = 0x4, offset = 0x4, fixed_abs, tag = 'smem constant byte address 0x4 - core index']
  #allocation1 [shape = 'u32[144,128]{1,0:T(1,128)}', space=vmem, size = 0x12000, scoped, tag = 'internal scratch']
  %s0 = inlined_call_operand.vmem [shape: f32[8,128], index: 0, kind: input, shape index: {}]
  %s1 = inlined_call_operand.vmem [shape: f32[8,256], index: 1, kind: input, shape index: {}]
  %s2 = inlined_call_operand.hbm [shape: f32[128,768], index: 2, kind: input, shape index: {}]
  %s3 = inlined_call_operand.hbm [shape: f32[256,768], index: 3, kind: input, shape index: {}]
  %s4 = inlined_call_operand.vmem [shape: f32[1,768], index: 4, kind: input, shape index: {}]
  %s5 = inlined_call_operand.vmem [shape: f32[1,768], index: 5, kind: input, shape index: {}]
  %s6 = inlined_call_operand.vmem [shape: f32[8,256], index: 6, kind: output, shape index: {}]
  %s7 = sld [smem:[#allocation0]]
  $region42: #{_complex_gru_cell_impl.1} parent=0
    _
  %s9 = ssub.s32 1, %s7
  %s10 = scalar_select 0, %s9, %s7
  $region1: #{_complex_gru_cell_impl.1} parent=0
    #allocation2 [shape = 'u8[393216]{0}', space=vmem, size = 0x60000, scoped, tag = 'input window, operand 2, single buffered']
    #allocation3 [shape = 's32[1]{0}', space=sflag, size = 0x4, scoped, tag = 'scoped memory for _complex_gru_cell_impl.1']
    #allocation4 [shape = 'u8[786432]{0}', space=vmem, size = 0xc0000, scoped, tag = 'input window, operand 3, single buffered']
    #allocation5 [shape = 's32[1]{0}', space=sflag, size = 0x4, scoped, tag = 'scoped memory for _complex_gru_cell_impl.1']
    %11 = vsyncpa [#allocation3], 0
    %12 = vsyncpa [#allocation5], 0
    // Predicated region
    $region2: #{_complex_gru_cell_impl.1} parent=1 // pred_check
      _
    $region3: #{_complex_gru_cell_impl.1} parent=1 // pred_check_branch
      %14 = sbr.rel (0) target = $region5
    $region4: #{_complex_gru_cell_impl.1} parent=1 // pred_region
      _
    $region5: #{_complex_gru_cell_impl.1} parent=1 // pred_fallthru
      _
    // Predicated region
    $region6: #{_complex_gru_cell_impl.1} parent=1 // pred_check
      _
    $region7: #{_complex_gru_cell_impl.1} parent=1 // pred_check_branch
      %16 = sbr.rel (0) target = $region9
    $region8: #{_complex_gru_cell_impl.1} parent=1 // pred_region
      _
    $region9: #{_complex_gru_cell_impl.1} parent=1 // pred_fallthru
      _
    // Predicated region
    $region10: #{_complex_gru_cell_impl.1} parent=1 // pred_check
      _
    $region11: #{_complex_gru_cell_impl.1} parent=1 // pred_check_branch
      %18 = sbr.rel (0) target = $region13
    $region12: #{_complex_gru_cell_impl.1} parent=1 // pred_region
      %s20 = ssub.s32 12288, 12288
      %21 = vsyncadd [#allocation3], %s20
      %s22 = sshll.u32 [#allocation2], 4
      %s23 = int_to_ptr.vmem [resolvable:$true] %s22
      %28 = dma.hbm_to_vmem [thread:$0]  %s2, 12288, %s23, [#allocation3], 768, 768, 48
    $region13: #{_complex_gru_cell_impl.1} parent=1 // pred_fallthru
      _
    // Predicated region
    $region14: #{_complex_gru_cell_impl.1} parent=1 // pred_check
      _
    $region15: #{_complex_gru_cell_impl.1} parent=1 // pred_check_branch
      %30 = sbr.rel (0) target = $region17
    $region16: #{_complex_gru_cell_impl.1} parent=1 // pred_region
      %s32 = ssub.s32 24576, 24576
      %33 = vsyncadd [#allocation5], %s32
      %s34 = sshll.u32 [#allocation4], 4
      %s35 = int_to_ptr.vmem [resolvable:$true] %s34
      %40 = dma.hbm_to_vmem [thread:$0]  %s3, 24576, %s35, [#allocation5], 768, 768, 48
    $region17: #{_complex_gru_cell_impl.1} parent=1 // pred_fallthru
      _
    // Predicated region
    $region18: #{_complex_gru_cell_impl.1} parent=1 // pred_check
      _
    $region19: #{_complex_gru_cell_impl.1} parent=1 // pred_check_branch
      %42 = sbr.rel (0) target = $region21
    $region20: #{_complex_gru_cell_impl.1} parent=1 // pred_region
      _
    $region21: #{_complex_gru_cell_impl.1} parent=1 // pred_fallthru
      _
    // Predicated region
    $region22: #{_complex_gru_cell_impl.1} parent=1 // pred_check
      _
    $region23: #{_complex_gru_cell_impl.1} parent=1 // pred_check_branch
      %44 = sbr.rel (0) target = $region25
    $region24: #{_complex_gru_cell_impl.1} parent=1 // pred_region
      _
    $region25: #{_complex_gru_cell_impl.1} parent=1 // pred_fallthru
      _
    // Predicated region
    $region26: #{_complex_gru_cell_impl.1} parent=1 // pred_check
      _
    $region27: #{_complex_gru_cell_impl.1} parent=1 // pred_check_branch
      %46 = sbr.rel (0) target = $region29
    $region28: #{_complex_gru_cell_impl.1} parent=1 // pred_region
      %47 = dma.done [#allocation3], 12288
    $region29: #{_complex_gru_cell_impl.1} parent=1 // pred_fallthru
      _
    // Predicated region
    $region30: #{_complex_gru_cell_impl.1} parent=1 // pred_check
      _
    $region31: #{_complex_gru_cell_impl.1} parent=1 // pred_check_branch
      %49 = sbr.rel (0) target = $region33
    $region32: #{_complex_gru_cell_impl.1} parent=1 // pred_region
      %50 = dma.done [#allocation5], 24576
    $region33: #{_complex_gru_cell_impl.1} parent=1 // pred_fallthru
      _
    %v51 = vld [vmem:[%s1] sm:$0xff]
    %v52 = vld [vmem:[%s1 + $0x8] sm:$0xff]
    %v53 = vld [vmem:[%s0] sm:$0xff]
    %v54 = vld [vmem:[#allocation2] sm:$0xff]
    %v55 = vld [vmem:[#allocation2 + $0x8] sm:$0xff]
    %v56 = vld [vmem:[#allocation2 + $0x10] sm:$0xff]
    %v57 = vld [vmem:[#allocation2 + $0x18] sm:$0xff]
    %v58 = vld [vmem:[#allocation2 + $0x20] sm:$0xff]
    %v59 = vld [vmem:[#allocation2 + $0x28] sm:$0xff]
    %v60 = vld [vmem:[#allocation2 + $0x30] sm:$0xff]
    %v61 = vld [vmem:[#allocation2 + $0x38] sm:$0xff]
    %v62 = vld [vmem:[#allocation2 + $0x40] sm:$0xff]
    %v63 = vld [vmem:[#allocation2 + $0x48] sm:$0xff]
    %v64 = vld [vmem:[#allocation2 + $0x50] sm:$0xff]
    %v65 = vld [vmem:[#allocation2 + $0x58] sm:$0xff]
    %v66 = vld [vmem:[#allocation2 + $0x60] sm:$0xff]
    %v67 = vld [vmem:[#allocation2 + $0x68] sm:$0xff]
    %v68 = vld [vmem:[#allocation2 + $0x70] sm:$0xff]
    %v69 = vld [vmem:[#allocation2 + $0x78] sm:$0xff]
    %v70 = vld [vmem:[#allocation2 + $0x80] sm:$0xff]
    %v71 = vld [vmem:[#allocation2 + $0x88] sm:$0xff]
    %v72 = vld [vmem:[#allocation2 + $0x90] sm:$0xff]
    %v73 = vld [vmem:[#allocation2 + $0x98] sm:$0xff]
    %v74 = vld [vmem:[#allocation2 + $0xa0] sm:$0xff]
    %v75 = vld [vmem:[#allocation2 + $0xa8] sm:$0xff]
    %v76 = vld [vmem:[#allocation2 + $0xb0] sm:$0xff]
    %v77 = vld [vmem:[#allocation2 + $0xb8] sm:$0xff]
    %v78 = vld [vmem:[#allocation2 + $0xc0] sm:$0xff]
    %v79 = vld [vmem:[#allocation2 + $0xc8] sm:$0xff]
    %v80 = vld [vmem:[#allocation2 + $0xd0] sm:$0xff]
    %v81 = vld [vmem:[#allocation2 + $0xd8] sm:$0xff]
    %v82 = vld [vmem:[#allocation2 + $0xe0] sm:$0xff]
    %v83 = vld [vmem:[#allocation2 + $0xe8] sm:$0xff]
    %v84 = vld [vmem:[#allocation2 + $0xf0] sm:$0xff]
    %v85 = vld [vmem:[#allocation2 + $0xf8] sm:$0xff]
    %v86 = vld [vmem:[#allocation2 + $0x100] sm:$0xff]
    %v87 = vld [vmem:[#allocation2 + $0x108] sm:$0xff]
    %v88 = vld [vmem:[#allocation2 + $0x110] sm:$0xff]
    %v89 = vld [vmem:[#allocation2 + $0x118] sm:$0xff]
    %v90 = vld [vmem:[#allocation2 + $0x120] sm:$0xff]
    %v91 = vld [vmem:[#allocation2 + $0x128] sm:$0xff]
    %v92 = vld [vmem:[#allocation2 + $0x130] sm:$0xff]
    %v93 = vld [vmem:[#allocation2 + $0x138] sm:$0xff]
    %v94 = vld [vmem:[#allocation2 + $0x140] sm:$0xff]
    %v95 = vld [vmem:[#allocation2 + $0x148] sm:$0xff]
    %v96 = vld [vmem:[#allocation2 + $0x150] sm:$0xff]
    %v97 = vld [vmem:[#allocation2 + $0x158] sm:$0xff]
    %v98 = vld [vmem:[#allocation2 + $0x160] sm:$0xff]
    %v99 = vld [vmem:[#allocation2 + $0x168] sm:$0xff]
    %v100 = vld [vmem:[#allocation2 + $0x170] sm:$0xff]
    %v101 = vld [vmem:[#allocation2 + $0x178] sm:$0xff]
    %v102 = vld [vmem:[#allocation2 + $0x180] sm:$0xff]
    %v103 = vld [vmem:[#allocation2 + $0x188] sm:$0xff]
    %v104 = vld [vmem:[#allocation2 + $0x190] sm:$0xff]
    %v105 = vld [vmem:[#allocation2 + $0x198] sm:$0xff]
    %v106 = vld [vmem:[#allocation2 + $0x1a0] sm:$0xff]
    %v107 = vld [vmem:[#allocation2 + $0x1a8] sm:$0xff]
    %v108 = vld [vmem:[#allocation2 + $0x1b0] sm:$0xff]
    %v109 = vld [vmem:[#allocation2 + $0x1b8] sm:$0xff]
    %v110 = vld [vmem:[#allocation2 + $0x1c0] sm:$0xff]
    %v111 = vld [vmem:[#allocation2 + $0x1c8] sm:$0xff]
    %v112 = vld [vmem:[#allocation2 + $0x1d0] sm:$0xff]
    %v113 = vld [vmem:[#allocation2 + $0x1d8] sm:$0xff]
    %v114 = vld [vmem:[#allocation2 + $0x1e0] sm:$0xff]
    %v115 = vld [vmem:[#allocation2 + $0x1e8] sm:$0xff]
    %v116 = vld [vmem:[#allocation2 + $0x1f0] sm:$0xff]
    %v117 = vld [vmem:[#allocation2 + $0x1f8] sm:$0xff]
    %v118 = vld [vmem:[#allocation2 + $0x200] sm:$0xff]
    %v119 = vld [vmem:[#allocation2 + $0x208] sm:$0xff]
    %v120 = vld [vmem:[#allocation2 + $0x210] sm:$0xff]
    %v121 = vld [vmem:[#allocation2 + $0x218] sm:$0xff]
    %v122 = vld [vmem:[#allocation2 + $0x220] sm:$0xff]
    %v123 = vld [vmem:[#allocation2 + $0x228] sm:$0xff]
    %v124 = vld [vmem:[#allocation2 + $0x230] sm:$0xff]
    %v125 = vld [vmem:[#allocation2 + $0x238] sm:$0xff]
    %v126 = vld [vmem:[#allocation2 + $0x240] sm:$0xff]
    %v127 = vld [vmem:[#allocation2 + $0x248] sm:$0xff]
    %v128 = vld [vmem:[#allocation2 + $0x250] sm:$0xff]
    %v129 = vld [vmem:[#allocation2 + $0x258] sm:$0xff]
    %v130 = vld [vmem:[#allocation2 + $0x260] sm:$0xff]
    %v131 = vld [vmem:[#allocation2 + $0x268] sm:$0xff]
    %v132 = vld [vmem:[#allocation2 + $0x270] sm:$0xff]
    %v133 = vld [vmem:[#allocation2 + $0x278] sm:$0xff]
    %v134 = vld [vmem:[#allocation2 + $0x280] sm:$0xff]
    %v135 = vld [vmem:[#allocation2 + $0x288] sm:$0xff]
    %v136 = vld [vmem:[#allocation2 + $0x290] sm:$0xff]
    %v137 = vld [vmem:[#allocation2 + $0x298] sm:$0xff]
    %v138 = vld [vmem:[#allocation2 + $0x2a0] sm:$0xff]
    %v139 = vld [vmem:[#allocation2 + $0x2a8] sm:$0xff]
    %v140 = vld [vmem:[#allocation2 + $0x2b0] sm:$0xff]
    %v141 = vld [vmem:[#allocation2 + $0x2b8] sm:$0xff]
    %v142 = vld [vmem:[#allocation2 + $0x2c0] sm:$0xff]
    %v143 = vld [vmem:[#allocation2 + $0x2c8] sm:$0xff]
    %v144 = vld [vmem:[#allocation2 + $0x2d0] sm:$0xff]
    %v145 = vld [vmem:[#allocation2 + $0x2d8] sm:$0xff]
    %v146 = vld [vmem:[#allocation2 + $0x2e0] sm:$0xff]
    %v147 = vld [vmem:[#allocation2 + $0x2e8] sm:$0xff]
    %v148 = vld [vmem:[#allocation2 + $0x2f0] sm:$0xff]
    %v149 = vld [vmem:[#allocation2 + $0x2f8] sm:$0xff]
    %v150 = vld [vmem:[%s4] sm:$0x3f]
    %v152 = vlaneseq
    %v153 = vshrl.u32 %v152, 7
    %v154 = vsub.s32 0, %v153
    %v155 = vrot.slane %v150, %v154
    %v156 = vlaneseq
    %v157 = vshrl.u32 %v156, 7
    %v158 = vsub.s32 1, %v157
    %v159 = vrot.slane %v150, %v158
    %v160 = vlaneseq
    %v161 = vshrl.u32 %v160, 7
    %v162 = vsub.s32 2, %v161
    %v163 = vrot.slane %v150, %v162
    %v164 = vlaneseq
    %v165 = vshrl.u32 %v164, 7
    %v166 = vsub.s32 3, %v165
    %v167 = vrot.slane %v150, %v166
    %v168 = vlaneseq
    %v169 = vshrl.u32 %v168, 7
    %v170 = vsub.s32 4, %v169
    %v171 = vrot.slane %v150, %v170
    %v172 = vlaneseq
    %v173 = vshrl.u32 %v172, 7
    %v174 = vsub.s32 5, %v173
    %v175 = vrot.slane %v150, %v174
    %182 = vmatprep.subr.mxu0 %v55
    %183 = vmatpush1.msra.mxu0 %v54
    %184 = vmatprep.subr.mxu0 %v61
    %185 = vmatpush1.msra.mxu0 %v60
    %186 = vmatprep.subr.mxu0 %v67
    %187 = vmatpush1.msra.mxu0 %v66
    %188 = vmatprep.subr.mxu0 %v73
    %189 = vmatpush1.msra.mxu0 %v72
    %190 = vmatprep.subr.mxu0 %v79
    %191 = vmatpush1.msra.mxu0 %v78
    %192 = vmatprep.subr.mxu0 %v85
    %193 = vmatpush1.msra.mxu0 %v84
    %194 = vmatprep.subr.mxu0 %v91
    %195 = vmatpush1.msra.mxu0 %v90
    %196 = vmatprep.subr.mxu0 %v97
    %197 = vmatpush1.msra.mxu0 %v96
    %198 = vmatprep.subr.mxu0 %v103
    %199 = vmatpush1.msra.mxu0 %v102
    %200 = vmatprep.subr.mxu0 %v109
    %201 = vmatpush1.msra.mxu0 %v108
    %202 = vmatprep.subr.mxu0 %v115
    %203 = vmatpush1.msra.mxu0 %v114
    %204 = vmatprep.subr.mxu0 %v121
    %205 = vmatpush1.msra.mxu0 %v120
    %206 = vmatprep.subr.mxu0 %v127
    %207 = vmatpush1.msra.mxu0 %v126
    %208 = vmatprep.subr.mxu0 %v133
    %209 = vmatpush1.msra.mxu0 %v132
    %210 = vmatprep.subr.mxu0 %v139
    %211 = vmatpush1.msra.mxu0 %v138
    %212 = vmatprep.subr.mxu0 %v145
    %213 = vmatpush1.msra.mxu0 %v144
    %214 = vmatprep.subr.mxu0 0.0
    %215 = vmatpush1.msra.mxu0 0.0
    %216 = vmatprep.subr.mxu0 0.0
    %217 = vmatpush1.msra.mxu0 0.0
    %218 = vmatprep.subr.mxu0 0.0
    %219 = vmatpush1.msra.mxu0 0.0
    %220 = vmatprep.subr.mxu0 0.0
    %221 = vmatpush1.msra.mxu0 0.0
    %222 = vmatprep.subr.mxu0 0.0
    %223 = vmatpush1.msra.mxu0 0.0
    %224 = vmatprep.subr.mxu0 0.0
    %225 = vmatpush1.msra.mxu0 0.0
    %226 = vmatprep.subr.mxu0 0.0
    %227 = vmatpush1.msra.mxu0 0.0
    %228 = vmatprep.subr.mxu0 0.0
    %229 = vmatpush1.msra.mxu0 0.0
    %230 = vmatprep.subr.mxu0 0.0
    %231 = vmatpush1.msra.mxu0 0.0
    %232 = vmatprep.subr.mxu0 0.0
    %233 = vmatpush1.msra.mxu0 0.0
    %234 = vmatprep.subr.mxu0 0.0
    %235 = vmatpush1.msra.mxu0 0.0
    %236 = vmatprep.subr.mxu0 0.0
    %237 = vmatpush1.msra.mxu0 0.0
    %238 = vmatprep.subr.mxu0 0.0
    %239 = vmatpush1.msra.mxu0 0.0
    %240 = vmatprep.subr.mxu0 0.0
    %241 = vmatpush1.msra.mxu0 0.0
    %242 = vmatprep.subr.mxu0 0.0
    %243 = vmatpush1.msra.mxu0 0.0
    %244 = vmatprep.subr.mxu0 0.0
    %245 = vmatpush1.msra.mxu0 0.0
    %246 = vmatprep.mubr.f32.mxu0 0.0
    %247 = vmatmul.mubr.f32.gmra.mrb[0].mxu0 %v53
    %v248 = vpop.f32.mrb[0].mxu0
    %v249 = vadd.f32 %v155, %v248
    %v250 = vpop.f32.mrb[0].mxu0
    %v251 = vadd.f32 %v159, %v250
    %252 = vdwg.mxu0
    %253 = vmatprep.subr.mxu0 %v57
    %254 = vmatpush1.msra.mxu0 %v56
    %255 = vmatprep.subr.mxu0 %v63
    %256 = vmatpush1.msra.mxu0 %v62
    %257 = vmatprep.subr.mxu0 %v69
    %258 = vmatpush1.msra.mxu0 %v68
    %259 = vmatprep.subr.mxu0 %v75
    %260 = vmatpush1.msra.mxu0 %v74
    %261 = vmatprep.subr.mxu0 %v81
    %262 = vmatpush1.msra.mxu0 %v80
    %263 = vmatprep.subr.mxu0 %v87
    %264 = vmatpush1.msra.mxu0 %v86
    %265 = vmatprep.subr.mxu0 %v93
    %266 = vmatpush1.msra.mxu0 %v92
    %267 = vmatprep.subr.mxu0 %v99
    %268 = vmatpush1.msra.mxu0 %v98
    %269 = vmatprep.subr.mxu0 %v105
    %270 = vmatpush1.msra.mxu0 %v104
    %271 = vmatprep.subr.mxu0 %v111
    %272 = vmatpush1.msra.mxu0 %v110
    %273 = vmatprep.subr.mxu0 %v117
    %274 = vmatpush1.msra.mxu0 %v116
    %275 = vmatprep.subr.mxu0 %v123
    %276 = vmatpush1.msra.mxu0 %v122
    %277 = vmatprep.subr.mxu0 %v129
    %278 = vmatpush1.msra.mxu0 %v128
    %279 = vmatprep.subr.mxu0 %v135
    %280 = vmatpush1.msra.mxu0 %v134
    %281 = vmatprep.subr.mxu0 %v141
    %282 = vmatpush1.msra.mxu0 %v140
    %283 = vmatprep.subr.mxu0 %v147
    %284 = vmatpush1.msra.mxu0 %v146
    %285 = vmatprep.subr.mxu0 0.0
    %286 = vmatpush1.msra.mxu0 0.0
    %287 = vmatprep.subr.mxu0 0.0
    %288 = vmatpush1.msra.mxu0 0.0
    %289 = vmatprep.subr.mxu0 0.0
    %290 = vmatpush1.msra.mxu0 0.0
    %291 = vmatprep.subr.mxu0 0.0
    %292 = vmatpush1.msra.mxu0 0.0
    %293 = vmatprep.subr.mxu0 0.0
    %294 = vmatpush1.msra.mxu0 0.0
    %295 = vmatprep.subr.mxu0 0.0
    %296 = vmatpush1.msra.mxu0 0.0
    %297 = vmatprep.subr.mxu0 0.0
    %298 = vmatpush1.msra.mxu0 0.0
    %299 = vmatprep.subr.mxu0 0.0
    %300 = vmatpush1.msra.mxu0 0.0
    %301 = vmatprep.subr.mxu0 0.0
    %302 = vmatpush1.msra.mxu0 0.0
    %303 = vmatprep.subr.mxu0 0.0
    %304 = vmatpush1.msra.mxu0 0.0
    %305 = vmatprep.subr.mxu0 0.0
    %306 = vmatpush1.msra.mxu0 0.0
    %307 = vmatprep.subr.mxu0 0.0
    %308 = vmatpush1.msra.mxu0 0.0
    %309 = vmatprep.subr.mxu0 0.0
    %310 = vmatpush1.msra.mxu0 0.0
    %311 = vmatprep.subr.mxu0 0.0
    %312 = vmatpush1.msra.mxu0 0.0
    %313 = vmatprep.subr.mxu0 0.0
    %314 = vmatpush1.msra.mxu0 0.0
    %315 = vmatprep.subr.mxu0 0.0
    %316 = vmatpush1.msra.mxu0 0.0
    %317 = vmatprep.mubr.f32.mxu0 0.0
    %318 = vmatmul.mubr.f32.gmra.mrb[0].mxu0 %v53
    %v319 = vpop.f32.mrb[0].mxu0
    %v320 = vadd.f32 %v163, %v319
    %v321 = vpop.f32.mrb[0].mxu0
    %v322 = vadd.f32 %v167, %v321
    %323 = vdwg.mxu0
    %324 = vmatprep.subr.mxu0 %v59
    %325 = vmatpush1.msra.mxu0 %v58
    %326 = vmatprep.subr.mxu0 %v65
    %327 = vmatpush1.msra.mxu0 %v64
    %328 = vmatprep.subr.mxu0 %v71
    %329 = vmatpush1.msra.mxu0 %v70
    %330 = vmatprep.subr.mxu0 %v77
    %331 = vmatpush1.msra.mxu0 %v76
    %332 = vmatprep.subr.mxu0 %v83
    %333 = vmatpush1.msra.mxu0 %v82
    %334 = vmatprep.subr.mxu0 %v89
    %335 = vmatpush1.msra.mxu0 %v88
    %336 = vmatprep.subr.mxu0 %v95
    %337 = vmatpush1.msra.mxu0 %v94
    %338 = vmatprep.subr.mxu0 %v101
    %339 = vmatpush1.msra.mxu0 %v100
    %340 = vmatprep.subr.mxu0 %v107
    %341 = vmatpush1.msra.mxu0 %v106
    %342 = vmatprep.subr.mxu0 %v113
    %343 = vmatpush1.msra.mxu0 %v112
    %344 = vmatprep.subr.mxu0 %v119
    %345 = vmatpush1.msra.mxu0 %v118
    %346 = vmatprep.subr.mxu0 %v125
    %347 = vmatpush1.msra.mxu0 %v124
    %348 = vmatprep.subr.mxu0 %v131
    %349 = vmatpush1.msra.mxu0 %v130
    %350 = vmatprep.subr.mxu0 %v137
    %351 = vmatpush1.msra.mxu0 %v136
    %352 = vmatprep.subr.mxu0 %v143
    %353 = vmatpush1.msra.mxu0 %v142
    %354 = vmatprep.subr.mxu0 %v149
    %355 = vmatpush1.msra.mxu0 %v148
    %356 = vmatprep.subr.mxu0 0.0
    %357 = vmatpush1.msra.mxu0 0.0
    %358 = vmatprep.subr.mxu0 0.0
    %359 = vmatpush1.msra.mxu0 0.0
    %360 = vmatprep.subr.mxu0 0.0
    %361 = vmatpush1.msra.mxu0 0.0
    %362 = vmatprep.subr.mxu0 0.0
    %363 = vmatpush1.msra.mxu0 0.0
    %364 = vmatprep.subr.mxu0 0.0
    %365 = vmatpush1.msra.mxu0 0.0
    %366 = vmatprep.subr.mxu0 0.0
    %367 = vmatpush1.msra.mxu0 0.0
    %368 = vmatprep.subr.mxu0 0.0
    %369 = vmatpush1.msra.mxu0 0.0
    %370 = vmatprep.subr.mxu0 0.0
    %371 = vmatpush1.msra.mxu0 0.0
    %372 = vmatprep.subr.mxu0 0.0
    %373 = vmatpush1.msra.mxu0 0.0
    %374 = vmatprep.subr.mxu0 0.0
    %375 = vmatpush1.msra.mxu0 0.0
    %376 = vmatprep.subr.mxu0 0.0
    %377 = vmatpush1.msra.mxu0 0.0
    %378 = vmatprep.subr.mxu0 0.0
    %379 = vmatpush1.msra.mxu0 0.0
    %380 = vmatprep.subr.mxu0 0.0
    %381 = vmatpush1.msra.mxu0 0.0
    %382 = vmatprep.subr.mxu0 0.0
    %383 = vmatpush1.msra.mxu0 0.0
    %384 = vmatprep.subr.mxu0 0.0
    %385 = vmatpush1.msra.mxu0 0.0
    %386 = vmatprep.subr.mxu0 0.0
    %387 = vmatpush1.msra.mxu0 0.0
    %388 = vmatprep.mubr.f32.mxu0 0.0
    %389 = vmatmul.mubr.f32.gmra.mrb[0].mxu0 %v53
    %v390 = vpop.f32.mrb[0].mxu0
    %v391 = vadd.f32 %v171, %v390
    %v392 = vpop.f32.mrb[0].mxu0
    %v393 = vadd.f32 %v175, %v392
    %394 = vdwg.mxu0
    %v395 = vld [vmem:[#allocation4] sm:$0xff]
    %v396 = vld [vmem:[#allocation4 + $0x8] sm:$0xff]
    %v397 = vld [vmem:[#allocation4 + $0x10] sm:$0xff]
    %v398 = vld [vmem:[#allocation4 + $0x18] sm:$0xff]
    %v399 = vld [vmem:[#allocation4 + $0x20] sm:$0xff]
    %v400 = vld [vmem:[#allocation4 + $0x28] sm:$0xff]
    %v401 = vld [vmem:[#allocation4 + $0x30] sm:$0xff]
    %v402 = vld [vmem:[#allocation4 + $0x38] sm:$0xff]
    %v403 = vld [vmem:[#allocation4 + $0x40] sm:$0xff]
    %v404 = vld [vmem:[#allocation4 + $0x48] sm:$0xff]
    %v405 = vld [vmem:[#allocation4 + $0x50] sm:$0xff]
    %v406 = vld [vmem:[#allocation4 + $0x58] sm:$0xff]
    %v407 = vld [vmem:[#allocation4 + $0x60] sm:$0xff]
    %v408 = vld [vmem:[#allocation4 + $0x68] sm:$0xff]
    %v409 = vld [vmem:[#allocation4 + $0x70] sm:$0xff]
    %v410 = vld [vmem:[#allocation4 + $0x78] sm:$0xff]
    %v411 = vld [vmem:[#allocation4 + $0x80] sm:$0xff]
    %v412 = vld [vmem:[#allocation4 + $0x88] sm:$0xff]
    %v413 = vld [vmem:[#allocation4 + $0x90] sm:$0xff]
    %v414 = vld [vmem:[#allocation4 + $0x98] sm:$0xff]
    %v415 = vld [vmem:[#allocation4 + $0xa0] sm:$0xff]
    %v416 = vld [vmem:[#allocation4 + $0xa8] sm:$0xff]
    %v417 = vld [vmem:[#allocation4 + $0xb0] sm:$0xff]
    %v418 = vld [vmem:[#allocation4 + $0xb8] sm:$0xff]
    %v419 = vld [vmem:[#allocation4 + $0xc0] sm:$0xff]
    %v420 = vld [vmem:[#allocation4 + $0xc8] sm:$0xff]
    %v421 = vld [vmem:[#allocation4 + $0xd0] sm:$0xff]
    %v422 = vld [vmem:[#allocation4 + $0xd8] sm:$0xff]
    %v423 = vld [vmem:[#allocation4 + $0xe0] sm:$0xff]
    %v424 = vld [vmem:[#allocation4 + $0xe8] sm:$0xff]
    %v425 = vld [vmem:[#allocation4 + $0xf0] sm:$0xff]
    %v426 = vld [vmem:[#allocation4 + $0xf8] sm:$0xff]
    %v427 = vld [vmem:[#allocation4 + $0x100] sm:$0xff]
    %v428 = vld [vmem:[#allocation4 + $0x108] sm:$0xff]
    %v429 = vld [vmem:[#allocation4 + $0x110] sm:$0xff]
    %v430 = vld [vmem:[#allocation4 + $0x118] sm:$0xff]
    %v431 = vld [vmem:[#allocation4 + $0x120] sm:$0xff]
    %v432 = vld [vmem:[#allocation4 + $0x128] sm:$0xff]
    %v433 = vld [vmem:[#allocation4 + $0x130] sm:$0xff]
    %v434 = vld [vmem:[#allocation4 + $0x138] sm:$0xff]
    %v435 = vld [vmem:[#allocation4 + $0x140] sm:$0xff]
    %v436 = vld [vmem:[#allocation4 + $0x148] sm:$0xff]
    %v437 = vld [vmem:[#allocation4 + $0x150] sm:$0xff]
    %v438 = vld [vmem:[#allocation4 + $0x158] sm:$0xff]
    %v439 = vld [vmem:[#allocation4 + $0x160] sm:$0xff]
    %v440 = vld [vmem:[#allocation4 + $0x168] sm:$0xff]
    %v441 = vld [vmem:[#allocation4 + $0x170] sm:$0xff]
    %v442 = vld [vmem:[#allocation4 + $0x178] sm:$0xff]
    %v443 = vld [vmem:[#allocation4 + $0x180] sm:$0xff]
    %v444 = vld [vmem:[#allocation4 + $0x188] sm:$0xff]
    %v445 = vld [vmem:[#allocation4 + $0x190] sm:$0xff]
    %v446 = vld [vmem:[#allocation4 + $0x198] sm:$0xff]
    %v447 = vld [vmem:[#allocation4 + $0x1a0] sm:$0xff]
    %v448 = vld [vmem:[#allocation4 + $0x1a8] sm:$0xff]
    %v449 = vld [vmem:[#allocation4 + $0x1b0] sm:$0xff]
    %v450 = vld [vmem:[#allocation4 + $0x1b8] sm:$0xff]
    %v451 = vld [vmem:[#allocation4 + $0x1c0] sm:$0xff]
    %v452 = vld [vmem:[#allocation4 + $0x1c8] sm:$0xff]
    %v453 = vld [vmem:[#allocation4 + $0x1d0] sm:$0xff]
    %v454 = vld [vmem:[#allocation4 + $0x1d8] sm:$0xff]
    %v455 = vld [vmem:[#allocation4 + $0x1e0] sm:$0xff]
    %v456 = vld [vmem:[#allocation4 + $0x1e8] sm:$0xff]
    %v457 = vld [vmem:[#allocation4 + $0x1f0] sm:$0xff]
    %v458 = vld [vmem:[#allocation4 + $0x1f8] sm:$0xff]
    %v459 = vld [vmem:[#allocation4 + $0x200] sm:$0xff]
    %v460 = vld [vmem:[#allocation4 + $0x208] sm:$0xff]
    %v461 = vld [vmem:[#allocation4 + $0x210] sm:$0xff]
    %v462 = vld [vmem:[#allocation4 + $0x218] sm:$0xff]
    %v463 = vld [vmem:[#allocation4 + $0x220] sm:$0xff]
    %v464 = vld [vmem:[#allocation4 + $0x228] sm:$0xff]
    %v465 = vld [vmem:[#allocation4 + $0x230] sm:$0xff]
    %v466 = vld [vmem:[#allocation4 + $0x238] sm:$0xff]
    %v467 = vld [vmem:[#allocation4 + $0x240] sm:$0xff]
    %v468 = vld [vmem:[#allocation4 + $0x248] sm:$0xff]
    %v469 = vld [vmem:[#allocation4 + $0x250] sm:$0xff]
    %v470 = vld [vmem:[#allocation4 + $0x258] sm:$0xff]
    %v471 = vld [vmem:[#allocation4 + $0x260] sm:$0xff]
    %v472 = vld [vmem:[#allocation4 + $0x268] sm:$0xff]
    %v473 = vld [vmem:[#allocation4 + $0x270] sm:$0xff]
    %v474 = vld [vmem:[#allocation4 + $0x278] sm:$0xff]
    %v475 = vld [vmem:[#allocation4 + $0x280] sm:$0xff]
    %v476 = vld [vmem:[#allocation4 + $0x288] sm:$0xff]
    %v477 = vld [vmem:[#allocation4 + $0x290] sm:$0xff]
    %v478 = vld [vmem:[#allocation4 + $0x298] sm:$0xff]
    %v479 = vld [vmem:[#allocation4 + $0x2a0] sm:$0xff]
    %v480 = vld [vmem:[#allocation4 + $0x2a8] sm:$0xff]
    %v481 = vld [vmem:[#allocation4 + $0x2b0] sm:$0xff]
    %v482 = vld [vmem:[#allocation4 + $0x2b8] sm:$0xff]
    %v483 = vld [vmem:[#allocation4 + $0x2c0] sm:$0xff]
    %v484 = vld [vmem:[#allocation4 + $0x2c8] sm:$0xff]
    %v485 = vld [vmem:[#allocation4 + $0x2d0] sm:$0xff]
    %v486 = vld [vmem:[#allocation4 + $0x2d8] sm:$0xff]
    %v487 = vld [vmem:[#allocation4 + $0x2e0] sm:$0xff]
    %v488 = vld [vmem:[#allocation4 + $0x2e8] sm:$0xff]
    %v489 = vld [vmem:[#allocation4 + $0x2f0] sm:$0xff]
    %v490 = vld [vmem:[#allocation4 + $0x2f8] sm:$0xff]
    %v491 = vld [vmem:[#allocation4 + $0x300] sm:$0xff]
    %v492 = vld [vmem:[#allocation4 + $0x308] sm:$0xff]
    %v493 = vld [vmem:[#allocation4 + $0x310] sm:$0xff]
    %v494 = vld [vmem:[#allocation4 + $0x318] sm:$0xff]
    %v495 = vld [vmem:[#allocation4 + $0x320] sm:$0xff]
    %v496 = vld [vmem:[#allocation4 + $0x328] sm:$0xff]
    %v497 = vld [vmem:[#allocation4 + $0x330] sm:$0xff]
    %v498 = vld [vmem:[#allocation4 + $0x338] sm:$0xff]
    %v499 = vld [vmem:[#allocation4 + $0x340] sm:$0xff]
    %v500 = vld [vmem:[#allocation4 + $0x348] sm:$0xff]
    %v501 = vld [vmem:[#allocation4 + $0x350] sm:$0xff]
    %v502 = vld [vmem:[#allocation4 + $0x358] sm:$0xff]
    %v503 = vld [vmem:[#allocation4 + $0x360] sm:$0xff]
    %v504 = vld [vmem:[#allocation4 + $0x368] sm:$0xff]
    %v505 = vld [vmem:[#allocation4 + $0x370] sm:$0xff]
    %v506 = vld [vmem:[#allocation4 + $0x378] sm:$0xff]
    %v507 = vld [vmem:[#allocation4 + $0x380] sm:$0xff]
    %v508 = vld [vmem:[#allocation4 + $0x388] sm:$0xff]
    %v509 = vld [vmem:[#allocation4 + $0x390] sm:$0xff]
    %v510 = vld [vmem:[#allocation4 + $0x398] sm:$0xff]
    %v511 = vld [vmem:[#allocation4 + $0x3a0] sm:$0xff]
    %v512 = vld [vmem:[#allocation4 + $0x3a8] sm:$0xff]
    %v513 = vld [vmem:[#allocation4 + $0x3b0] sm:$0xff]
    %v514 = vld [vmem:[#allocation4 + $0x3b8] sm:$0xff]
    %v515 = vld [vmem:[#allocation4 + $0x3c0] sm:$0xff]
    %v516 = vld [vmem:[#allocation4 + $0x3c8] sm:$0xff]
    %v517 = vld [vmem:[#allocation4 + $0x3d0] sm:$0xff]
    %v518 = vld [vmem:[#allocation4 + $0x3d8] sm:$0xff]
    %v519 = vld [vmem:[#allocation4 + $0x3e0] sm:$0xff]
    %v520 = vld [vmem:[#allocation4 + $0x3e8] sm:$0xff]
    %v521 = vld [vmem:[#allocation4 + $0x3f0] sm:$0xff]
    %v522 = vld [vmem:[#allocation4 + $0x3f8] sm:$0xff]
    %v523 = vld [vmem:[#allocation4 + $0x400] sm:$0xff]
    %v524 = vld [vmem:[#allocation4 + $0x408] sm:$0xff]
    %v525 = vld [vmem:[#allocation4 + $0x410] sm:$0xff]
    %v526 = vld [vmem:[#allocation4 + $0x418] sm:$0xff]
    %v527 = vld [vmem:[#allocation4 + $0x420] sm:$0xff]
    %v528 = vld [vmem:[#allocation4 + $0x428] sm:$0xff]
    %v529 = vld [vmem:[#allocation4 + $0x430] sm:$0xff]
    %v530 = vld [vmem:[#allocation4 + $0x438] sm:$0xff]
    %v531 = vld [vmem:[#allocation4 + $0x440] sm:$0xff]
    %v532 = vld [vmem:[#allocation4 + $0x448] sm:$0xff]
    %v533 = vld [vmem:[#allocation4 + $0x450] sm:$0xff]
    %v534 = vld [vmem:[#allocation4 + $0x458] sm:$0xff]
    %v535 = vld [vmem:[#allocation4 + $0x460] sm:$0xff]
    %v536 = vld [vmem:[#allocation4 + $0x468] sm:$0xff]
    %v537 = vld [vmem:[#allocation4 + $0x470] sm:$0xff]
    %v538 = vld [vmem:[#allocation4 + $0x478] sm:$0xff]
    %v539 = vld [vmem:[#allocation4 + $0x480] sm:$0xff]
    %v540 = vld [vmem:[#allocation4 + $0x488] sm:$0xff]
    %v541 = vld [vmem:[#allocation4 + $0x490] sm:$0xff]
    %v542 = vld [vmem:[#allocation4 + $0x498] sm:$0xff]
    %v543 = vld [vmem:[#allocation4 + $0x4a0] sm:$0xff]
    %v544 = vld [vmem:[#allocation4 + $0x4a8] sm:$0xff]
    %v545 = vld [vmem:[#allocation4 + $0x4b0] sm:$0xff]
    %v546 = vld [vmem:[#allocation4 + $0x4b8] sm:$0xff]
    %v547 = vld [vmem:[#allocation4 + $0x4c0] sm:$0xff]
    %v548 = vld [vmem:[#allocation4 + $0x4c8] sm:$0xff]
    %v549 = vld [vmem:[#allocation4 + $0x4d0] sm:$0xff]
    %v550 = vld [vmem:[#allocation4 + $0x4d8] sm:$0xff]
    %v551 = vld [vmem:[#allocation4 + $0x4e0] sm:$0xff]
    %v552 = vld [vmem:[#allocation4 + $0x4e8] sm:$0xff]
    %v553 = vld [vmem:[#allocation4 + $0x4f0] sm:$0xff]
    %v554 = vld [vmem:[#allocation4 + $0x4f8] sm:$0xff]
    %v555 = vld [vmem:[#allocation4 + $0x500] sm:$0xff]
    %v556 = vld [vmem:[#allocation4 + $0x508] sm:$0xff]
    %v557 = vld [vmem:[#allocation4 + $0x510] sm:$0xff]
    %v558 = vld [vmem:[#allocation4 + $0x518] sm:$0xff]
    %v559 = vld [vmem:[#allocation4 + $0x520] sm:$0xff]
    %v560 = vld [vmem:[#allocation4 + $0x528] sm:$0xff]
    %v561 = vld [vmem:[#allocation4 + $0x530] sm:$0xff]
    %v562 = vld [vmem:[#allocation4 + $0x538] sm:$0xff]
    %v563 = vld [vmem:[#allocation4 + $0x540] sm:$0xff]
    %v564 = vld [vmem:[#allocation4 + $0x548] sm:$0xff]
    %v565 = vld [vmem:[#allocation4 + $0x550] sm:$0xff]
    %v566 = vld [vmem:[#allocation4 + $0x558] sm:$0xff]
    %v567 = vld [vmem:[#allocation4 + $0x560] sm:$0xff]
    %v568 = vld [vmem:[#allocation4 + $0x568] sm:$0xff]
    %v569 = vld [vmem:[#allocation4 + $0x570] sm:$0xff]
    %v570 = vld [vmem:[#allocation4 + $0x578] sm:$0xff]
    %v571 = vld [vmem:[#allocation4 + $0x580] sm:$0xff]
    %v572 = vld [vmem:[#allocation4 + $0x588] sm:$0xff]
    %v573 = vld [vmem:[#allocation4 + $0x590] sm:$0xff]
    %v574 = vld [vmem:[#allocation4 + $0x598] sm:$0xff]
    %v575 = vld [vmem:[#allocation4 + $0x5a0] sm:$0xff]
    %v576 = vld [vmem:[#allocation4 + $0x5a8] sm:$0xff]
    %v577 = vld [vmem:[#allocation4 + $0x5b0] sm:$0xff]
    %v578 = vld [vmem:[#allocation4 + $0x5b8] sm:$0xff]
    %v579 = vld [vmem:[#allocation4 + $0x5c0] sm:$0xff]
    %v580 = vld [vmem:[#allocation4 + $0x5c8] sm:$0xff]
    %v581 = vld [vmem:[#allocation4 + $0x5d0] sm:$0xff]
    %v582 = vld [vmem:[#allocation4 + $0x5d8] sm:$0xff]
    %v583 = vld [vmem:[#allocation4 + $0x5e0] sm:$0xff]
    %v584 = vld [vmem:[#allocation4 + $0x5e8] sm:$0xff]
    %v585 = vld [vmem:[#allocation4 + $0x5f0] sm:$0xff]
    %v586 = vld [vmem:[#allocation4 + $0x5f8] sm:$0xff]
    %v587 = vld [vmem:[%s5] sm:$0x3f]
    %v589 = vlaneseq
    %v590 = vshrl.u32 %v589, 7
    %v591 = vsub.s32 0, %v590
    %v592 = vrot.slane %v587, %v591
    %v593 = vlaneseq
    %v594 = vshrl.u32 %v593, 7
    %v595 = vsub.s32 1, %v594
    %v596 = vrot.slane %v587, %v595
    %v597 = vlaneseq
    %v598 = vshrl.u32 %v597, 7
    %v599 = vsub.s32 2, %v598
    %v600 = vrot.slane %v587, %v599
    %v601 = vlaneseq
    %v602 = vshrl.u32 %v601, 7
    %v603 = vsub.s32 3, %v602
    %v604 = vrot.slane %v587, %v603
    %v605 = vlaneseq
    %v606 = vshrl.u32 %v605, 7
    %v607 = vsub.s32 4, %v606
    %v608 = vrot.slane %v587, %v607
    %v609 = vlaneseq
    %v610 = vshrl.u32 %v609, 7
    %v611 = vsub.s32 5, %v610
    %v612 = vrot.slane %v587, %v611
    %619 = vmatprep.subr.mxu0 %v396
    %620 = vmatpush1.msra.mxu0 %v395
    %621 = vmatprep.subr.mxu0 %v402
    %622 = vmatpush1.msra.mxu0 %v401
    %623 = vmatprep.subr.mxu0 %v408
    %624 = vmatpush1.msra.mxu0 %v407
    %625 = vmatprep.subr.mxu0 %v414
    %626 = vmatpush1.msra.mxu0 %v413
    %627 = vmatprep.subr.mxu0 %v420
    %628 = vmatpush1.msra.mxu0 %v419
    %629 = vmatprep.subr.mxu0 %v426
    %630 = vmatpush1.msra.mxu0 %v425
    %631 = vmatprep.subr.mxu0 %v432
    %632 = vmatpush1.msra.mxu0 %v431
    %633 = vmatprep.subr.mxu0 %v438
    %634 = vmatpush1.msra.mxu0 %v437
    %635 = vmatprep.subr.mxu0 %v444
    %636 = vmatpush1.msra.mxu0 %v443
    %637 = vmatprep.subr.mxu0 %v450
    %638 = vmatpush1.msra.mxu0 %v449
    %639 = vmatprep.subr.mxu0 %v456
    %640 = vmatpush1.msra.mxu0 %v455
    %641 = vmatprep.subr.mxu0 %v462
    %642 = vmatpush1.msra.mxu0 %v461
    %643 = vmatprep.subr.mxu0 %v468
    %644 = vmatpush1.msra.mxu0 %v467
    %645 = vmatprep.subr.mxu0 %v474
    %646 = vmatpush1.msra.mxu0 %v473
    %647 = vmatprep.subr.mxu0 %v480
    %648 = vmatpush1.msra.mxu0 %v479
    %649 = vmatprep.subr.mxu0 %v486
    %650 = vmatpush1.msra.mxu0 %v485
    %651 = vmatprep.subr.mxu0 %v492
    %652 = vmatpush1.msra.mxu0 %v491
    %653 = vmatprep.subr.mxu0 %v498
    %654 = vmatpush1.msra.mxu0 %v497
    %655 = vmatprep.subr.mxu0 %v504
    %656 = vmatpush1.msra.mxu0 %v503
    %657 = vmatprep.subr.mxu0 %v510
    %658 = vmatpush1.msra.mxu0 %v509
    %659 = vmatprep.subr.mxu0 %v516
    %660 = vmatpush1.msra.mxu0 %v515
    %661 = vmatprep.subr.mxu0 %v522
    %662 = vmatpush1.msra.mxu0 %v521
    %663 = vmatprep.subr.mxu0 %v528
    %664 = vmatpush1.msra.mxu0 %v527
    %665 = vmatprep.subr.mxu0 %v534
    %666 = vmatpush1.msra.mxu0 %v533
    %667 = vmatprep.subr.mxu0 %v540
    %668 = vmatpush1.msra.mxu0 %v539
    %669 = vmatprep.subr.mxu0 %v546
    %670 = vmatpush1.msra.mxu0 %v545
    %671 = vmatprep.subr.mxu0 %v552
    %672 = vmatpush1.msra.mxu0 %v551
    %673 = vmatprep.subr.mxu0 %v558
    %674 = vmatpush1.msra.mxu0 %v557
    %675 = vmatprep.subr.mxu0 %v564
    %676 = vmatpush1.msra.mxu0 %v563
    %677 = vmatprep.subr.mxu0 %v570
    %678 = vmatpush1.msra.mxu0 %v569
    %679 = vmatprep.subr.mxu0 %v576
    %680 = vmatpush1.msra.mxu0 %v575
    %681 = vmatprep.subr.mxu0 %v582
    %682 = vmatpush1.msra.mxu0 %v581
    %683 = vmatprep.mubr.f32.mxu0 %v52
    %684 = vmatmul.mubr.f32.gmra.mrb[0].mxu0 %v51
    %v685 = vpop.f32.mrb[0].mxu0
    %v686 = vadd.f32 %v592, %v685
    %v687 = vpop.f32.mrb[0].mxu0
    %v688 = vadd.f32 %v596, %v687
    %689 = vdwg.mxu0
    %690 = vmatprep.subr.mxu0 %v398
    %691 = vmatpush1.msra.mxu0 %v397
    %692 = vmatprep.subr.mxu0 %v404
    %693 = vmatpush1.msra.mxu0 %v403
    %694 = vmatprep.subr.mxu0 %v410
    %695 = vmatpush1.msra.mxu0 %v409
    %696 = vmatprep.subr.mxu0 %v416
    %697 = vmatpush1.msra.mxu0 %v415
    %698 = vmatprep.subr.mxu0 %v422
    %699 = vmatpush1.msra.mxu0 %v421
    %700 = vmatprep.subr.mxu0 %v428
    %701 = vmatpush1.msra.mxu0 %v427
    %702 = vmatprep.subr.mxu0 %v434
    %703 = vmatpush1.msra.mxu0 %v433
    %704 = vmatprep.subr.mxu0 %v440
    %705 = vmatpush1.msra.mxu0 %v439
    %706 = vmatprep.subr.mxu0 %v446
    %707 = vmatpush1.msra.mxu0 %v445
    %708 = vmatprep.subr.mxu0 %v452
    %709 = vmatpush1.msra.mxu0 %v451
    %710 = vmatprep.subr.mxu0 %v458
    %711 = vmatpush1.msra.mxu0 %v457
    %712 = vmatprep.subr.mxu0 %v464
    %713 = vmatpush1.msra.mxu0 %v463
    %714 = vmatprep.subr.mxu0 %v470
    %715 = vmatpush1.msra.mxu0 %v469
    %716 = vmatprep.subr.mxu0 %v476
    %717 = vmatpush1.msra.mxu0 %v475
    %718 = vmatprep.subr.mxu0 %v482
    %719 = vmatpush1.msra.mxu0 %v481
    %720 = vmatprep.subr.mxu0 %v488
    %721 = vmatpush1.msra.mxu0 %v487
    %722 = vmatprep.subr.mxu0 %v494
    %723 = vmatpush1.msra.mxu0 %v493
    %724 = vmatprep.subr.mxu0 %v500
    %725 = vmatpush1.msra.mxu0 %v499
    %726 = vmatprep.subr.mxu0 %v506
    %727 = vmatpush1.msra.mxu0 %v505
    %728 = vmatprep.subr.mxu0 %v512
    %729 = vmatpush1.msra.mxu0 %v511
    %730 = vmatprep.subr.mxu0 %v518
    %731 = vmatpush1.msra.mxu0 %v517
    %732 = vmatprep.subr.mxu0 %v524
    %733 = vmatpush1.msra.mxu0 %v523
    %734 = vmatprep.subr.mxu0 %v530
    %735 = vmatpush1.msra.mxu0 %v529
    %736 = vmatprep.subr.mxu0 %v536
    %737 = vmatpush1.msra.mxu0 %v535
    %738 = vmatprep.subr.mxu0 %v542
    %739 = vmatpush1.msra.mxu0 %v541
    %740 = vmatprep.subr.mxu0 %v548
    %741 = vmatpush1.msra.mxu0 %v547
    %742 = vmatprep.subr.mxu0 %v554
    %743 = vmatpush1.msra.mxu0 %v553
    %744 = vmatprep.subr.mxu0 %v560
    %745 = vmatpush1.msra.mxu0 %v559
    %746 = vmatprep.subr.mxu0 %v566
    %747 = vmatpush1.msra.mxu0 %v565
    %748 = vmatprep.subr.mxu0 %v572
    %749 = vmatpush1.msra.mxu0 %v571
    %750 = vmatprep.subr.mxu0 %v578
    %751 = vmatpush1.msra.mxu0 %v577
    %752 = vmatprep.subr.mxu0 %v584
    %753 = vmatpush1.msra.mxu0 %v583
    %754 = vmatprep.mubr.f32.mxu0 %v52
    %755 = vmatmul.mubr.f32.gmra.mrb[0].mxu0 %v51
    %v756 = vpop.f32.mrb[0].mxu0
    %v757 = vadd.f32 %v600, %v756
    %v758 = vpop.f32.mrb[0].mxu0
    %v759 = vadd.f32 %v604, %v758
    %760 = vdwg.mxu0
    %761 = vmatprep.subr.mxu0 %v400
    %762 = vmatpush1.msra.mxu0 %v399
    %763 = vmatprep.subr.mxu0 %v406
    %764 = vmatpush1.msra.mxu0 %v405
    %765 = vmatprep.subr.mxu0 %v412
    %766 = vmatpush1.msra.mxu0 %v411
    %767 = vmatprep.subr.mxu0 %v418
    %768 = vmatpush1.msra.mxu0 %v417
    %769 = vmatprep.subr.mxu0 %v424
    %770 = vmatpush1.msra.mxu0 %v423
    %771 = vmatprep.subr.mxu0 %v430
    %772 = vmatpush1.msra.mxu0 %v429
    %773 = vmatprep.subr.mxu0 %v436
    %774 = vmatpush1.msra.mxu0 %v435
    %775 = vmatprep.subr.mxu0 %v442
    %776 = vmatpush1.msra.mxu0 %v441
    %777 = vmatprep.subr.mxu0 %v448
    %778 = vmatpush1.msra.mxu0 %v447
    %779 = vmatprep.subr.mxu0 %v454
    %780 = vmatpush1.msra.mxu0 %v453
    %781 = vmatprep.subr.mxu0 %v460
    %782 = vmatpush1.msra.mxu0 %v459
    %783 = vmatprep.subr.mxu0 %v466
    %784 = vmatpush1.msra.mxu0 %v465
    %785 = vmatprep.subr.mxu0 %v472
    %786 = vmatpush1.msra.mxu0 %v471
    %787 = vmatprep.subr.mxu0 %v478
    %788 = vmatpush1.msra.mxu0 %v477
    %789 = vmatprep.subr.mxu0 %v484
    %790 = vmatpush1.msra.mxu0 %v483
    %791 = vmatprep.subr.mxu0 %v490
    %792 = vmatpush1.msra.mxu0 %v489
    %793 = vmatprep.subr.mxu0 %v496
    %794 = vmatpush1.msra.mxu0 %v495
    %795 = vmatprep.subr.mxu0 %v502
    %796 = vmatpush1.msra.mxu0 %v501
    %797 = vmatprep.subr.mxu0 %v508
    %798 = vmatpush1.msra.mxu0 %v507
    %799 = vmatprep.subr.mxu0 %v514
    %800 = vmatpush1.msra.mxu0 %v513
    %801 = vmatprep.subr.mxu0 %v520
    %802 = vmatpush1.msra.mxu0 %v519
    %803 = vmatprep.subr.mxu0 %v526
    %804 = vmatpush1.msra.mxu0 %v525
    %805 = vmatprep.subr.mxu0 %v532
    %806 = vmatpush1.msra.mxu0 %v531
    %807 = vmatprep.subr.mxu0 %v538
    %808 = vmatpush1.msra.mxu0 %v537
    %809 = vmatprep.subr.mxu0 %v544
    %810 = vmatpush1.msra.mxu0 %v543
    %811 = vmatprep.subr.mxu0 %v550
    %812 = vmatpush1.msra.mxu0 %v549
    %813 = vmatprep.subr.mxu0 %v556
    %814 = vmatpush1.msra.mxu0 %v555
    %815 = vmatprep.subr.mxu0 %v562
    %816 = vmatpush1.msra.mxu0 %v561
    %817 = vmatprep.subr.mxu0 %v568
    %818 = vmatpush1.msra.mxu0 %v567
    %819 = vmatprep.subr.mxu0 %v574
    %820 = vmatpush1.msra.mxu0 %v573
    %821 = vmatprep.subr.mxu0 %v580
    %822 = vmatpush1.msra.mxu0 %v579
    %823 = vmatprep.subr.mxu0 %v586
    %824 = vmatpush1.msra.mxu0 %v585
    %825 = vmatprep.mubr.f32.mxu0 %v52
    %826 = vmatmul.mubr.f32.gmra.mrb[0].mxu0 %v51
    %v827 = vpop.f32.mrb[0].mxu0
    %v828 = vadd.f32 %v608, %v827
    %v829 = vpop.f32.mrb[0].mxu0
    %v830 = vadd.f32 %v612, %v829
    %831 = vdwg.mxu0
    %v832 = vadd.f32 %v249, %v686
    %v833 = vxor.u32 %v832, 2147483648
    %v834 = vmul.f32 %v833, 1.442695
    %v835 = vpow.pop %v834
    %v836 = vadd.f32 %v835, 1.0
    %v837 = vrcp.pop %v836
    %v838 = vmul.f32 1.0, %v837
    %v839 = vadd.f32 %v251, %v688
    %v840 = vxor.u32 %v839, 2147483648
    %v841 = vmul.f32 %v840, 1.442695
    %v842 = vpow.pop %v841
    %v843 = vadd.f32 %v842, 1.0
    %v844 = vrcp.pop %v843
    %v845 = vmul.f32 1.0, %v844
    %v846 = vadd.f32 %v322, %v759
    %v847 = vxor.u32 %v846, 2147483648
    %v848 = vmul.f32 %v847, 1.442695
    %v849 = vpow.pop %v848
    %v850 = vadd.f32 %v849, 1.0
    %v851 = vrcp.pop %v850
    %v852 = vmul.f32 1.0, %v851
    %v853 = vadd.f32 %v391, %v828
    %v854 = vxor.u32 %v853, 2147483648
    %v855 = vmul.f32 %v854, 1.442695
    %v856 = vpow.pop %v855
    %v857 = vadd.f32 %v856, 1.0
    %v858 = vrcp.pop %v857
    %v859 = vmul.f32 1.0, %v858
    %v860 = vmul.f32 %v838, %v757
    %v861 = vadd.f32 %v320, %v860
    %v862 = vmul.f32 %v852, %v830
    %v863 = vsub.f32 %v861, %v862
    %v864 = vtanh.pop %v863
    %v865 = vmul.f32 %v838, %v830
    %v866 = vadd.f32 %v393, %v865
    %v867 = vmul.f32 %v852, %v757
    %v868 = vadd.f32 %v866, %v867
    %v869 = vtanh.pop %v868
    %v870 = vsub.f32 1.0, %v845
    %v871 = vmul.f32 %v870, %v864
    %v872 = vmul.f32 %v859, %v869
    %v873 = vadd.f32 %v871, %v872
    %v874 = vmul.f32 %v845, %v51
    %v875 = vadd.f32 %v873, %v874
    %v876 = vmul.f32 %v859, %v52
    %v877 = vsub.f32 %v875, %v876
    %878 = vst [vmem:[%s6] sm:$0xff] %v877
    %v879 = vmul.f32 %v870, %v869
    %v880 = vmul.f32 %v859, %v864
    %v881 = vsub.f32 %v879, %v880
    %v882 = vmul.f32 %v845, %v52
    %v883 = vadd.f32 %v881, %v882
    %v884 = vmul.f32 %v859, %v51
    %v885 = vadd.f32 %v883, %v884
    %886 = vst [vmem:[%s6 + $0x8] sm:$0xff] %v885
    // Predicated region
    $region34: #{_complex_gru_cell_impl.1} parent=1 // pred_check
      _
    $region35: #{_complex_gru_cell_impl.1} parent=1 // pred_check_branch
      %888 = sbr.rel (0) target = $region37
    $region36: #{_complex_gru_cell_impl.1} parent=1 // pred_region
      _
    $region37: #{_complex_gru_cell_impl.1} parent=1 // pred_fallthru
      _
    // Predicated region
    $region38: #{_complex_gru_cell_impl.1} parent=1 // pred_check
      _
    $region39: #{_complex_gru_cell_impl.1} parent=1 // pred_check_branch
      %890 = sbr.rel (0) target = $region41
    $region40: #{_complex_gru_cell_impl.1} parent=1 // pred_region
      _
    $region41: #{_complex_gru_cell_impl.1} parent=1 // pred_fallthru
      _
    %891 = vsyncpa [#allocation3], 1
    %892 = vsyncpa [#allocation5], 1

</llo_original>
